<compile_context>
chip_gen: v7x
topology: tpu7x:2x2x1
jax: 0.10.0
libtpu: 0.0.40
codegen_flags: <defaults>
</compile_context>

<pallas_src>
import jax
import jax.numpy as jnp
from jax.experimental import pallas as pl
from jax.experimental.pallas import tpu as pltpu

_NEG_FILL = -1e30  # bias for padded class columns -> never wins max, exp() == 0


def mlp_kernel(x_ref, w1_ref, b1_ref, w2_ref, b2_ref, w3_ref, b3_ref, o_ref):
    x = x_ref[...]  # bf16 (TILE_N, D_pad)

    # fc1 + ReLU  (bf16 MXU operands, f32 accumulation)
    h1 = jnp.dot(x, w1_ref[...], preferred_element_type=jnp.float32) + b1_ref[...]
    h1 = jnp.maximum(h1, 0.0)

    # dropout (eval mode -> identity)

    # fc2 + ReLU
    h2 = jnp.dot(h1.astype(jnp.bfloat16), w2_ref[...],
                 preferred_element_type=jnp.float32) + b2_ref[...]
    h2 = jnp.maximum(h2, 0.0)

    # dropout (eval mode -> identity)

    # fc3 (logits).  Padded class columns have zero weights and a -1e30 bias.
    logits = jnp.dot(h2.astype(jnp.bfloat16), w3_ref[...],
                     preferred_element_type=jnp.float32) + b3_ref[...]

    # log_softmax over the class axis (stable; pad columns contribute exp() == 0)
    m = jnp.max(logits, axis=-1, keepdims=True)
    shifted = logits - m
    lse = jnp.log(jnp.sum(jnp.exp(shifted), axis=-1, keepdims=True))
    o_ref[...] = shifted - lse


def _round_up(a, m):
    return (a + m - 1) // m * m


def mlp_forward(x, w1, b1, w2, b2, w3, b3, *, tile_n=256):
    """x: (N, D) f32. w*: (in, out) f32. b*: (1, out) f32. Returns (N, C) f32 log-probs."""
    N, D = x.shape
    H1 = w1.shape[1]
    H2 = w2.shape[1]
    C = w3.shape[1]

    # Lane-aligned padded dims; adapt the batch tile for tiny batches.
    D_pad = _round_up(D, 128)
    C_pad = _round_up(C, 128)
    tile_n = min(tile_n, _round_up(N, 8))
    N_pad = _round_up(N, tile_n)

    # Host-side padding + bf16 casts for the MXU operands (halves DMA bytes).
    x_p = jnp.zeros((N_pad, D_pad), jnp.float32).at[:N, :D].set(x).astype(jnp.bfloat16)
    w1_p = jnp.zeros((D_pad, H1), jnp.float32).at[:D, :].set(w1).astype(jnp.bfloat16)
    w2_p = w2.astype(jnp.bfloat16)
    w3_p = jnp.zeros((H2, C_pad), jnp.float32).at[:, :C].set(w3).astype(jnp.bfloat16)
    b3_p = jnp.full((1, C_pad), _NEG_FILL, jnp.float32).at[:, :C].set(b3)

    grid = (N_pad // tile_n,)

    cost = pl.CostEstimate(
        flops=2 * N_pad * (D_pad * H1 + H1 * H2 + H2 * C_pad),
        transcendentals=N_pad * C_pad,
        bytes_accessed=(x_p.size * 2 + w1_p.size * 2 + w2_p.size * 2 + w3_p.size * 2
                        + b1.size * 4 + b2.size * 4 + b3_p.size * 4
                        + N_pad * C_pad * 4),
    )

    out = pl.pallas_call(
        mlp_kernel,
        out_shape=jax.ShapeDtypeStruct((N_pad, C_pad), jnp.float32),
        grid=grid,
        in_specs=[
            pl.BlockSpec((tile_n, D_pad), lambda i: (i, 0)),   # x tile, pipelined
            pl.BlockSpec((D_pad, H1), lambda i: (0, 0)),       # weights resident
            pl.BlockSpec((1, H1), lambda i: (0, 0)),
            pl.BlockSpec((H1, H2), lambda i: (0, 0)),
            pl.BlockSpec((1, H2), lambda i: (0, 0)),
            pl.BlockSpec((H2, C_pad), lambda i: (0, 0)),
            pl.BlockSpec((1, C_pad), lambda i: (0, 0)),
        ],
        out_specs=pl.BlockSpec((tile_n, C_pad), lambda i: (i, 0)),
        compiler_params=pltpu.CompilerParams(
            dimension_semantics=("parallel",),
            vmem_limit_bytes=32 * 1024 * 1024,  # fits comfortably within v7x's 64 MiB VMEM
        ),
        cost_estimate=cost,
    )(x_p, w1_p, b1, w2_p, b2, w3_p, b3_p)

    return out[:N, :C]


def init_params(key, input_size, n_classes):
    """Deterministic init mimicking nn.Linear's uniform(-1/sqrt(fan_in), 1/sqrt(fan_in))."""
    dims = [(input_size, 512), (512, 256), (256, n_classes)]
    params = []
    for (fan_in, fan_out) in dims:
        key, kw, kb = jax.random.split(key, 3)
        bound = 1.0 / jnp.sqrt(fan_in)
        w = jax.random.uniform(kw, (fan_in, fan_out), jnp.float32, -bound, bound)
        b = jax.random.uniform(kb, (1, fan_out), jnp.float32, -bound, bound)
        params.extend([w, b])
    return params


def _reference(x, w1, b1, w2, b2, w3, b3):
    h1 = jnp.maximum(x @ w1 + b1, 0.0)
    h2 = jnp.maximum(h1 @ w2 + b2, 0.0)
    logits = h2 @ w3 + b3
    return jax.nn.log_softmax(logits, axis=-1)


if __name__ == "__main__":
    key = jax.random.PRNGKey(0)
    key, kx = jax.random.split(key)

    N, input_size, n_classes = 8, 32, 10
    x = jax.random.normal(kx, (N, input_size), jnp.float32)
    w1, b1, w2, b2, w3, b3 = init_params(key, input_size, n_classes)

    out = mlp_forward(x, w1, b1, w2, b2, w3, b3)
    out = jax.block_until_ready(out)

    # sanity: shape, rows sum to ~1 in prob space, and loose match vs f32 reference
    assert out.shape == (N, n_classes)
    assert bool(jnp.allclose(jnp.sum(jnp.exp(out), axis=1), 1.0, atol=1e-4))
    ref = _reference(x, w1, b1, w2, b2, w3, b3)
    assert bool(jnp.allclose(out, ref, atol=1e-1, rtol=1e-1))  # bf16 MXU operands, f32 acc

    print("KERNEL_OK")
</pallas_src>

<mosaic_0001>
module attributes {stable_mosaic.version = 11 : i64} {
  func.func @mlp_kernel(%arg0: i32, %arg1: memref<8x128xbf16, #tpu.memory_space<vmem>>, %arg2: memref<128x512xbf16, #tpu.memory_space<vmem>>, %arg3: memref<1x512xf32, #tpu.memory_space<vmem>>, %arg4: memref<512x256xbf16, #tpu.memory_space<vmem>>, %arg5: memref<1x256xf32, #tpu.memory_space<vmem>>, %arg6: memref<256x128xbf16, #tpu.memory_space<vmem>>, %arg7: memref<1x128xf32, #tpu.memory_space<vmem>>, %arg8: memref<8x128xf32, #tpu.memory_space<vmem>>) attributes {dimension_semantics = [#tpu.dimension_semantics<parallel>], iteration_bounds = array<i64: 1>, scalar_prefetch = 0 : i64, scratch_operands = 0 : i64, tpu.core_type = #tpu.core_type<tc>, window_params = [{transform_indices = @transform_0, window_bounds = array<i64: 8, 128>}, {pipeline_mode = #tpu.pipeline_mode<synchronous>, transform_indices = @transform_1, window_bounds = array<i64: 128, 512>}, {pipeline_mode = #tpu.pipeline_mode<synchronous>, transform_indices = @transform_2, window_bounds = array<i64: 1, 512>}, {pipeline_mode = #tpu.pipeline_mode<synchronous>, transform_indices = @transform_3, window_bounds = array<i64: 512, 256>}, {pipeline_mode = #tpu.pipeline_mode<synchronous>, transform_indices = @transform_4, window_bounds = array<i64: 1, 256>}, {pipeline_mode = #tpu.pipeline_mode<synchronous>, transform_indices = @transform_5, window_bounds = array<i64: 256, 128>}, {pipeline_mode = #tpu.pipeline_mode<synchronous>, transform_indices = @transform_6, window_bounds = array<i64: 1, 128>}, {transform_indices = @transform_7, window_bounds = array<i64: 8, 128>}]} {
    %c0 = arith.constant 0 : index
    %c0_0 = arith.constant 0 : index
    %0 = vector.load %arg1[%c0, %c0_0] : memref<8x128xbf16, #tpu.memory_space<vmem>>, vector<8x128xbf16>
    %c0_1 = arith.constant 0 : index
    %c0_2 = arith.constant 0 : index
    %1 = vector.load %arg2[%c0_1, %c0_2] : memref<128x512xbf16, #tpu.memory_space<vmem>>, vector<128x512xbf16>
    %cst = arith.constant dense<0.000000e+00> : vector<8x512xf32>
    %2 = tpu.matmul %0, %1, %cst {dimension_numbers = #tpu.dot_dimension_numbers<[1], [0], [0], [1], [0, 0, 1, 1], [], []>} : vector<8x128xbf16>, vector<128x512xbf16>, vector<8x512xf32> -> vector<8x512xf32>
    %c0_3 = arith.constant 0 : index
    %c0_4 = arith.constant 0 : index
    %3 = vector.load %arg3[%c0_3, %c0_4] : memref<1x512xf32, #tpu.memory_space<vmem>>, vector<1x512xf32>
    %4 = vector.broadcast %3 : vector<1x512xf32> to vector<8x512xf32>
    %5 = arith.addf %2, %4 : vector<8x512xf32>
    %cst_5 = arith.constant 0.000000e+00 : f32
    %6 = vector.broadcast %cst_5 : f32 to vector<8x512xf32>
    %7 = arith.maximumf %5, %6 : vector<8x512xf32>
    %8 = arith.truncf %7 : vector<8x512xf32> to vector<8x512xbf16>
    %c0_6 = arith.constant 0 : index
    %c0_7 = arith.constant 0 : index
    %9 = vector.load %arg4[%c0_6, %c0_7] : memref<512x256xbf16, #tpu.memory_space<vmem>>, vector<512x256xbf16>
    %cst_8 = arith.constant dense<0.000000e+00> : vector<8x256xf32>
    %10 = tpu.matmul %8, %9, %cst_8 {dimension_numbers = #tpu.dot_dimension_numbers<[1], [0], [0], [1], [0, 0, 1, 1], [], []>} : vector<8x512xbf16>, vector<512x256xbf16>, vector<8x256xf32> -> vector<8x256xf32>
    %c0_9 = arith.constant 0 : index
    %c0_10 = arith.constant 0 : index
    %11 = vector.load %arg5[%c0_9, %c0_10] : memref<1x256xf32, #tpu.memory_space<vmem>>, vector<1x256xf32>
    %12 = vector.broadcast %11 : vector<1x256xf32> to vector<8x256xf32>
    %13 = arith.addf %10, %12 : vector<8x256xf32>
    %cst_11 = arith.constant 0.000000e+00 : f32
    %14 = vector.broadcast %cst_11 : f32 to vector<8x256xf32>
    %15 = arith.maximumf %13, %14 : vector<8x256xf32>
    %16 = arith.truncf %15 : vector<8x256xf32> to vector<8x256xbf16>
    %c0_12 = arith.constant 0 : index
    %c0_13 = arith.constant 0 : index
    %17 = vector.load %arg6[%c0_12, %c0_13] : memref<256x128xbf16, #tpu.memory_space<vmem>>, vector<256x128xbf16>
    %cst_14 = arith.constant dense<0.000000e+00> : vector<8x128xf32>
    %18 = tpu.matmul %16, %17, %cst_14 {dimension_numbers = #tpu.dot_dimension_numbers<[1], [0], [0], [1], [0, 0, 1, 1], [], []>} : vector<8x256xbf16>, vector<256x128xbf16>, vector<8x128xf32> -> vector<8x128xf32>
    %c0_15 = arith.constant 0 : index
    %c0_16 = arith.constant 0 : index
    %19 = vector.load %arg7[%c0_15, %c0_16] : memref<1x128xf32, #tpu.memory_space<vmem>>, vector<1x128xf32>
    %20 = vector.broadcast %19 : vector<1x128xf32> to vector<8x128xf32>
    %21 = arith.addf %18, %20 : vector<8x128xf32>
    %cst_17 = arith.constant dense<0xFF800000> : vector<8xf32>
    %22 = vector.multi_reduction <maximumf>, %21, %cst_17 [1] : vector<8x128xf32> to vector<8xf32>
    %23 = vector.shape_cast %22 : vector<8xf32> to vector<8x1xf32>
    %24 = vector.broadcast %23 : vector<8x1xf32> to vector<8x128xf32>
    %25 = arith.subf %21, %24 : vector<8x128xf32>
    %26 = math.exp %25 : vector<8x128xf32>
    %cst_18 = arith.constant dense<0.000000e+00> : vector<8xf32>
    %27 = vector.multi_reduction <add>, %26, %cst_18 [1] : vector<8x128xf32> to vector<8xf32>
    %28 = vector.shape_cast %27 : vector<8xf32> to vector<8x1xf32>
    %29 = math.log %28 : vector<8x1xf32>
    %30 = vector.broadcast %29 : vector<8x1xf32> to vector<8x128xf32>
    %31 = arith.subf %25, %30 : vector<8x128xf32>
    %c0_19 = arith.constant 0 : index
    %c0_20 = arith.constant 0 : index
    %32 = vector.load %arg8[%c0_19, %c0_20] : memref<8x128xf32, #tpu.memory_space<vmem>>, vector<8x128xf32>
    tpu.vector_store %arg8[%c0_19, %c0_20], %31 {strides = array<i32>} : memref<8x128xf32, #tpu.memory_space<vmem>>, vector<8x128xf32>,
    return
  }
  func.func @transform_0(%arg0: i32) -> (i32, i32) {
    %c0_i32 = arith.constant 0 : i32
    %c0_i32_0 = arith.constant 0 : i32
    return %arg0, %c0_i32 : i32, i32
  }
  func.func @transform_1(%arg0: i32) -> (i32, i32) {
    %c0_i32 = arith.constant 0 : i32
    %c0_i32_0 = arith.constant 0 : i32
    %c0_i32_1 = arith.constant 0 : i32
    return %c0_i32, %c0_i32_0 : i32, i32
  }
  func.func @transform_2(%arg0: i32) -> (i32, i32) {
    %c0_i32 = arith.constant 0 : i32
    %c0_i32_0 = arith.constant 0 : i32
    %c0_i32_1 = arith.constant 0 : i32
    return %c0_i32, %c0_i32_0 : i32, i32
  }
  func.func @transform_3(%arg0: i32) -> (i32, i32) {
    %c0_i32 = arith.constant 0 : i32
    %c0_i32_0 = arith.constant 0 : i32
    %c0_i32_1 = arith.constant 0 : i32
    return %c0_i32, %c0_i32_0 : i32, i32
  }
  func.func @transform_4(%arg0: i32) -> (i32, i32) {
    %c0_i32 = arith.constant 0 : i32
    %c0_i32_0 = arith.constant 0 : i32
    %c0_i32_1 = arith.constant 0 : i32
    return %c0_i32, %c0_i32_0 : i32, i32
  }
  func.func @transform_5(%arg0: i32) -> (i32, i32) {
    %c0_i32 = arith.constant 0 : i32
    %c0_i32_0 = arith.constant 0 : i32
    %c0_i32_1 = arith.constant 0 : i32
    return %c0_i32, %c0_i32_0 : i32, i32
  }
  func.func @transform_6(%arg0: i32) -> (i32, i32) {
    %c0_i32 = arith.constant 0 : i32
    %c0_i32_0 = arith.constant 0 : i32
    %c0_i32_1 = arith.constant 0 : i32
    return %c0_i32, %c0_i32_0 : i32, i32
  }
  func.func @transform_7(%arg0: i32) -> (i32, i32) {
    %c0_i32 = arith.constant 0 : i32
    %c0_i32_0 = arith.constant 0 : i32
    return %arg0, %c0_i32 : i32, i32
  }
}

</mosaic_0001>

<llo_original>
// kernel: tpu_custom_call.1
$region0: #{tpu_custom_call.1}
  #allocation0 [shape = 'u32[]', space=smem, size = 0x4, offset = 0x4, fixed_abs, tag = 'smem constant byte address 0x4 - core index']
  #allocation1 [shape = 'u32[144,128]{1,0:T(1,128)}', space=vmem, size = 0x12000, scoped, tag = 'internal scratch']
  %s0 = inlined_call_operand.hbm [shape: bf16[8,128], index: 0, kind: input, shape index: {}]
  %s1 = inlined_call_operand.hbm [shape: bf16[128,512], index: 1, kind: input, shape index: {}]
  %s2 = inlined_call_operand.vmem [shape: f32[1,512], index: 2, kind: input, shape index: {}]
  %s3 = inlined_call_operand.hbm [shape: bf16[512,256], index: 3, kind: input, shape index: {}]
  %s4 = inlined_call_operand.vmem [shape: f32[1,256], index: 4, kind: input, shape index: {}]
  %s5 = inlined_call_operand.hbm [shape: bf16[256,128], index: 5, kind: input, shape index: {}]
  %s6 = inlined_call_operand.vmem [shape: f32[1,128], index: 6, kind: input, shape index: {}]
  %s7 = inlined_call_operand.hbm [shape: f32[8,128], index: 7, kind: output, shape index: {}]
  %s8 = sld [smem:[#allocation0]]
  $region54: #{tpu_custom_call.1} parent=0
    _
  %s10 = ssub.s32 1, %s8
  %s11 = scalar_select 0, %s10, %s8
  $region1: #{tpu_custom_call.1} parent=0
    #allocation2 [shape = 'u8[2048]{0}', space=vmem, size = 0x800, scoped, tag = 'input window, operand 0, single buffered']
    #allocation3 [shape = 's32[1]{0}', space=sflag, size = 0x4, scoped, tag = 'scoped memory for tpu_custom_call.1']
    #allocation4 [shape = 's32[1]{0}', space=sflag, size = 0x4, scoped, tag = 'scoped memory for tpu_custom_call.1']
    #allocation5 [shape = 'u8[131072]{0}', space=vmem, size = 0x20000, scoped, tag = 'input window, operand 1, single buffered']
    #allocation6 [shape = 's32[1]{0}', space=sflag, size = 0x4, scoped, tag = 'scoped memory for tpu_custom_call.1']
    #allocation7 [shape = 'u8[262144]{0}', space=vmem, size = 0x40000, scoped, tag = 'input window, operand 3, single buffered']
    #allocation8 [shape = 'u8[65536]{0}', space=vmem, size = 0x10000, scoped, tag = 'input window, operand 5, single buffered']
    #allocation9 [shape = 's32[1]{0}', space=sflag, size = 0x4, scoped, tag = 'scoped memory for tpu_custom_call.1']
    #allocation10 [shape = 'u8[4096]{0}', space=vmem, size = 0x1000, scoped, tag = 'output window, operand 0, single buffered']
    %12 = vsyncpa [#allocation3], 0
    %13 = vsyncpa [#allocation6], 0
    %14 = vsyncpa [#allocation9], 0
    %15 = vsyncpa [#allocation4], 0
    // Predicated region
    $region2: #{tpu_custom_call.1} parent=1 // pred_check
      _
    $region3: #{tpu_custom_call.1} parent=1 // pred_check_branch
      %17 = sbr.rel (0) target = $region5
    $region4: #{tpu_custom_call.1} parent=1 // pred_region
      %s19 = ssub.s32 64, 64
      %20 = vsyncadd [#allocation3], %s19
      %s22 = sshll.u32 [#allocation2], 4
      %s23 = int_to_ptr.vmem [resolvable:$true] %s22
      %25 = dma.hbm_to_vmem [thread:$0]  %s0, 64, %s23, [#allocation3]
    $region5: #{tpu_custom_call.1} parent=1 // pred_fallthru
      _
    // Predicated region
    $region6: #{tpu_custom_call.1} parent=1 // pred_check
      _
    $region7: #{tpu_custom_call.1} parent=1 // pred_check_branch
      %27 = sbr.rel (0) target = $region9
    $region8: #{tpu_custom_call.1} parent=1 // pred_region
      %s29 = ssub.s32 4096, 4096
      %30 = vsyncadd [#allocation6], %s29
      %s31 = sshll.u32 [#allocation5], 4
      %s32 = int_to_ptr.vmem [resolvable:$true] %s31
      %37 = dma.hbm_to_vmem [thread:$0]  %s1, 4096, %s32, [#allocation6], 256, 256, 16
    $region9: #{tpu_custom_call.1} parent=1 // pred_fallthru
      _
    // Predicated region
    $region10: #{tpu_custom_call.1} parent=1 // pred_check
      _
    $region11: #{tpu_custom_call.1} parent=1 // pred_check_branch
      %39 = sbr.rel (0) target = $region13
    $region12: #{tpu_custom_call.1} parent=1 // pred_region
      _
    $region13: #{tpu_custom_call.1} parent=1 // pred_fallthru
      _
    // Predicated region
    $region14: #{tpu_custom_call.1} parent=1 // pred_check
      _
    $region15: #{tpu_custom_call.1} parent=1 // pred_check_branch
      %41 = sbr.rel (0) target = $region17
    $region16: #{tpu_custom_call.1} parent=1 // pred_region
      %s43 = ssub.s32 8192, 8192
      %44 = vsyncadd [#allocation6], %s43
      %s45 = sshll.u32 [#allocation7], 4
      %s46 = int_to_ptr.vmem [resolvable:$true] %s45
      %51 = dma.hbm_to_vmem [thread:$0]  %s3, 8192, %s46, [#allocation6], 128, 128, 8
    $region17: #{tpu_custom_call.1} parent=1 // pred_fallthru
      _
    // Predicated region
    $region18: #{tpu_custom_call.1} parent=1 // pred_check
      _
    $region19: #{tpu_custom_call.1} parent=1 // pred_check_branch
      %53 = sbr.rel (0) target = $region21
    $region20: #{tpu_custom_call.1} parent=1 // pred_region
      _
    $region21: #{tpu_custom_call.1} parent=1 // pred_fallthru
      _
    // Predicated region
    $region22: #{tpu_custom_call.1} parent=1 // pred_check
      _
    $region23: #{tpu_custom_call.1} parent=1 // pred_check_branch
      %55 = sbr.rel (0) target = $region25
    $region24: #{tpu_custom_call.1} parent=1 // pred_region
      %s57 = ssub.s32 2048, 2048
      %58 = vsyncadd [#allocation9], %s57
      %s59 = sshll.u32 [#allocation8], 4
      %s60 = int_to_ptr.vmem [resolvable:$true] %s59
      %65 = dma.hbm_to_vmem [thread:$0]  %s5, 2048, %s60, [#allocation9], 64, 64, 4
    $region25: #{tpu_custom_call.1} parent=1 // pred_fallthru
      _
    // Predicated region
    $region26: #{tpu_custom_call.1} parent=1 // pred_check
      _
    $region27: #{tpu_custom_call.1} parent=1 // pred_check_branch
      %67 = sbr.rel (0) target = $region29
    $region28: #{tpu_custom_call.1} parent=1 // pred_region
      _
    $region29: #{tpu_custom_call.1} parent=1 // pred_fallthru
      _
    // Predicated region
    $region30: #{tpu_custom_call.1} parent=1 // pred_check
      _
    $region31: #{tpu_custom_call.1} parent=1 // pred_check_branch
      %69 = sbr.rel (0) target = $region33
    $region32: #{tpu_custom_call.1} parent=1 // pred_region
      %70 = dma.done [#allocation3], 64
    $region33: #{tpu_custom_call.1} parent=1 // pred_fallthru
      _
    // Predicated region
    $region34: #{tpu_custom_call.1} parent=1 // pred_check
      _
    $region35: #{tpu_custom_call.1} parent=1 // pred_check_branch
      %72 = sbr.rel (0) target = $region37
    $region36: #{tpu_custom_call.1} parent=1 // pred_region
      %73 = dma.done [#allocation6], 4096
    $region37: #{tpu_custom_call.1} parent=1 // pred_fallthru
      _
    // Predicated region
    $region38: #{tpu_custom_call.1} parent=1 // pred_check
      _
    $region39: #{tpu_custom_call.1} parent=1 // pred_check_branch
      %75 = sbr.rel (0) target = $region41
    $region40: #{tpu_custom_call.1} parent=1 // pred_region
      %76 = dma.done [#allocation6], 8192
    $region41: #{tpu_custom_call.1} parent=1 // pred_fallthru
      _
    // Predicated region
    $region42: #{tpu_custom_call.1} parent=1 // pred_check
      _
    $region43: #{tpu_custom_call.1} parent=1 // pred_check_branch
      %78 = sbr.rel (0) target = $region45
    $region44: #{tpu_custom_call.1} parent=1 // pred_region
      %79 = dma.done [#allocation9], 2048
    $region45: #{tpu_custom_call.1} parent=1 // pred_fallthru
      _
    %v81 = vld [vmem:[#allocation2] sm:$0xf]
    %v82 = vld [vmem:[#allocation5] sm:$0xff]
    %v83 = vld [vmem:[#allocation5 + $0x8] sm:$0xff]
    %v84 = vld [vmem:[#allocation5 + $0x10] sm:$0xff]
    %v85 = vld [vmem:[#allocation5 + $0x18] sm:$0xff]
    %v86 = vld [vmem:[#allocation5 + $0x20] sm:$0xff]
    %v87 = vld [vmem:[#allocation5 + $0x28] sm:$0xff]
    %v88 = vld [vmem:[#allocation5 + $0x30] sm:$0xff]
    %v89 = vld [vmem:[#allocation5 + $0x38] sm:$0xff]
    %v90 = vld [vmem:[#allocation5 + $0x40] sm:$0xff]
    %v91 = vld [vmem:[#allocation5 + $0x48] sm:$0xff]
    %v92 = vld [vmem:[#allocation5 + $0x50] sm:$0xff]
    %v93 = vld [vmem:[#allocation5 + $0x58] sm:$0xff]
    %v94 = vld [vmem:[#allocation5 + $0x60] sm:$0xff]
    %v95 = vld [vmem:[#allocation5 + $0x68] sm:$0xff]
    %v96 = vld [vmem:[#allocation5 + $0x70] sm:$0xff]
    %v97 = vld [vmem:[#allocation5 + $0x78] sm:$0xff]
    %v98 = vld [vmem:[#allocation5 + $0x80] sm:$0xff]
    %v99 = vld [vmem:[#allocation5 + $0x88] sm:$0xff]
    %v100 = vld [vmem:[#allocation5 + $0x90] sm:$0xff]
    %v101 = vld [vmem:[#allocation5 + $0x98] sm:$0xff]
    %v102 = vld [vmem:[#allocation5 + $0xa0] sm:$0xff]
    %v103 = vld [vmem:[#allocation5 + $0xa8] sm:$0xff]
    %v104 = vld [vmem:[#allocation5 + $0xb0] sm:$0xff]
    %v105 = vld [vmem:[#allocation5 + $0xb8] sm:$0xff]
    %v106 = vld [vmem:[#allocation5 + $0xc0] sm:$0xff]
    %v107 = vld [vmem:[#allocation5 + $0xc8] sm:$0xff]
    %v108 = vld [vmem:[#allocation5 + $0xd0] sm:$0xff]
    %v109 = vld [vmem:[#allocation5 + $0xd8] sm:$0xff]
    %v110 = vld [vmem:[#allocation5 + $0xe0] sm:$0xff]
    %v111 = vld [vmem:[#allocation5 + $0xe8] sm:$0xff]
    %v112 = vld [vmem:[#allocation5 + $0xf0] sm:$0xff]
    %v113 = vld [vmem:[#allocation5 + $0xf8] sm:$0xff]
    %v114 = vld [vmem:[%s2] sm:$0xf]
    %v116 = vlaneseq
    %v117 = vshrl.u32 %v116, 7
    %v118 = vsub.s32 0, %v117
    %v119 = vrot.slane %v114, %v118
    %v120 = vlaneseq
    %v121 = vshrl.u32 %v120, 7
    %v122 = vsub.s32 1, %v121
    %v123 = vrot.slane %v114, %v122
    %v124 = vlaneseq
    %v125 = vshrl.u32 %v124, 7
    %v126 = vsub.s32 2, %v125
    %v127 = vrot.slane %v114, %v126
    %v128 = vlaneseq
    %v129 = vshrl.u32 %v128, 7
    %v130 = vsub.s32 3, %v129
    %v131 = vrot.slane %v114, %v130
    %v168 = vunpack.c.l.b16 %v82
    %v169 = vunpack.c.h.b16 %v82
    %v170 = vunpack.c.l.b16 %v83
    %v171 = vunpack.c.h.b16 %v83
    %v172 = vunpack.c.l.b16 %v84
    %v173 = vunpack.c.h.b16 %v84
    %v174 = vunpack.c.l.b16 %v85
    %v175 = vunpack.c.h.b16 %v85
    %v176 = vunpack.c.l.b16 %v86
    %v177 = vunpack.c.h.b16 %v86
    %v178 = vunpack.c.l.b16 %v87
    %v179 = vunpack.c.h.b16 %v87
    %v180 = vunpack.c.l.b16 %v88
    %v181 = vunpack.c.h.b16 %v88
    %v182 = vunpack.c.l.b16 %v89
    %v183 = vunpack.c.h.b16 %v89
    %v184 = vunpack.c.l.b16 %v90
    %v185 = vunpack.c.h.b16 %v90
    %v186 = vunpack.c.l.b16 %v91
    %v187 = vunpack.c.h.b16 %v91
    %v188 = vunpack.c.l.b16 %v92
    %v189 = vunpack.c.h.b16 %v92
    %v190 = vunpack.c.l.b16 %v93
    %v191 = vunpack.c.h.b16 %v93
    %v192 = vunpack.c.l.b16 %v94
    %v193 = vunpack.c.h.b16 %v94
    %v194 = vunpack.c.l.b16 %v95
    %v195 = vunpack.c.h.b16 %v95
    %v196 = vunpack.c.l.b16 %v96
    %v197 = vunpack.c.h.b16 %v96
    %v198 = vunpack.c.l.b16 %v97
    %v199 = vunpack.c.h.b16 %v97
    %v200 = vunpack.c.l.b16 %v98
    %v201 = vunpack.c.h.b16 %v98
    %v202 = vunpack.c.l.b16 %v99
    %v203 = vunpack.c.h.b16 %v99
    %v204 = vunpack.c.l.b16 %v100
    %v205 = vunpack.c.h.b16 %v100
    %v206 = vunpack.c.l.b16 %v101
    %v207 = vunpack.c.h.b16 %v101
    %v208 = vunpack.c.l.b16 %v102
    %v209 = vunpack.c.h.b16 %v102
    %v210 = vunpack.c.l.b16 %v103
    %v211 = vunpack.c.h.b16 %v103
    %v212 = vunpack.c.l.b16 %v104
    %v213 = vunpack.c.h.b16 %v104
    %v214 = vunpack.c.l.b16 %v105
    %v215 = vunpack.c.h.b16 %v105
    %v216 = vunpack.c.l.b16 %v106
    %v217 = vunpack.c.h.b16 %v106
    %v218 = vunpack.c.l.b16 %v107
    %v219 = vunpack.c.h.b16 %v107
    %v220 = vunpack.c.l.b16 %v108
    %v221 = vunpack.c.h.b16 %v108
    %v222 = vunpack.c.l.b16 %v109
    %v223 = vunpack.c.h.b16 %v109
    %v224 = vunpack.c.l.b16 %v110
    %v225 = vunpack.c.h.b16 %v110
    %v226 = vunpack.c.l.b16 %v111
    %v227 = vunpack.c.h.b16 %v111
    %v228 = vunpack.c.l.b16 %v112
    %v229 = vunpack.c.h.b16 %v112
    %v230 = vunpack.c.l.b16 %v113
    %v231 = vunpack.c.h.b16 %v113
    %v232 = vpack.c.b16 %v172, %v168
    %v233 = vpack.c.b16 %v173, %v169
    %v234 = vpack.c.b16 %v174, %v170
    %v235 = vpack.c.b16 %v175, %v171
    %v236 = vpack.c.b16 %v180, %v176
    %v237 = vpack.c.b16 %v181, %v177
    %v238 = vpack.c.b16 %v182, %v178
    %v239 = vpack.c.b16 %v183, %v179
    %v240 = vpack.c.b16 %v188, %v184
    %v241 = vpack.c.b16 %v189, %v185
    %v242 = vpack.c.b16 %v190, %v186
    %v243 = vpack.c.b16 %v191, %v187
    %v244 = vpack.c.b16 %v196, %v192
    %v245 = vpack.c.b16 %v197, %v193
    %v246 = vpack.c.b16 %v198, %v194
    %v247 = vpack.c.b16 %v199, %v195
    %v248 = vpack.c.b16 %v204, %v200
    %v249 = vpack.c.b16 %v205, %v201
    %v250 = vpack.c.b16 %v206, %v202
    %v251 = vpack.c.b16 %v207, %v203
    %v252 = vpack.c.b16 %v212, %v208
    %v253 = vpack.c.b16 %v213, %v209
    %v254 = vpack.c.b16 %v214, %v210
    %v255 = vpack.c.b16 %v215, %v211
    %v256 = vpack.c.b16 %v220, %v216
    %v257 = vpack.c.b16 %v221, %v217
    %v258 = vpack.c.b16 %v222, %v218
    %v259 = vpack.c.b16 %v223, %v219
    %v260 = vpack.c.b16 %v228, %v224
    %v261 = vpack.c.b16 %v229, %v225
    %v262 = vpack.c.b16 %v230, %v226
    %v263 = vpack.c.b16 %v231, %v227
    %296 = vmatprep.subr.bf16.mxu0 %v233
    %297 = vmatpush1.bf16.msra.mxu0 %v232
    %298 = vmatprep.subr.bf16.mxu0 %v237
    %299 = vmatpush1.bf16.msra.mxu0 %v236
    %300 = vmatprep.subr.bf16.mxu0 %v241
    %301 = vmatpush1.bf16.msra.mxu0 %v240
    %302 = vmatprep.subr.bf16.mxu0 %v245
    %303 = vmatpush1.bf16.msra.mxu0 %v244
    %304 = vmatprep.subr.bf16.mxu0 %v249
    %305 = vmatpush1.bf16.msra.mxu0 %v248
    %306 = vmatprep.subr.bf16.mxu0 %v253
    %307 = vmatpush1.bf16.msra.mxu0 %v252
    %308 = vmatprep.subr.bf16.mxu0 %v257
    %309 = vmatpush1.bf16.msra.mxu0 %v256
    %310 = vmatprep.subr.bf16.mxu0 %v261
    %311 = vmatpush1.bf16.msra.mxu0 %v260
    %312 = vmatprep.subr.bf16.mxu0 0
    %313 = vmatpush1.bf16.msra.mxu0 0
    %314 = vmatprep.subr.bf16.mxu0 0
    %315 = vmatpush1.bf16.msra.mxu0 0
    %316 = vmatprep.subr.bf16.mxu0 0
    %317 = vmatpush1.bf16.msra.mxu0 0
    %318 = vmatprep.subr.bf16.mxu0 0
    %319 = vmatpush1.bf16.msra.mxu0 0
    %320 = vmatprep.subr.bf16.mxu0 0
    %321 = vmatpush1.bf16.msra.mxu0 0
    %322 = vmatprep.subr.bf16.mxu0 0
    %323 = vmatpush1.bf16.msra.mxu0 0
    %324 = vmatprep.subr.bf16.mxu0 0
    %325 = vmatpush1.bf16.msra.mxu0 0
    %326 = vmatprep.subr.bf16.mxu0 0
    %327 = vmatpush1.bf16.msra.mxu0 0
    %328 = vmatprep.mubr.bf16.mxu0 0
    %329 = vmatmul.mubr.bf16.gmra.mrb[0].mxu0 %v81
    %v330 = vpop.f32.mrb[0].mxu0
    %v331 = vadd.f32 %v119, %v330
    %v332 = vpop.f32.mrb[0].mxu0
    %v333 = vadd.f32 %v123, %v332
    %v334 = vpop.f32.mrb[0].mxu0
    %v335 = vpop.f32.mrb[0].mxu0
    %336 = vdwg.mxu0
    %337 = vmatprep.subr.bf16.mxu0 %v235
    %338 = vmatpush1.bf16.msra.mxu0 %v234
    %339 = vmatprep.subr.bf16.mxu0 %v239
    %340 = vmatpush1.bf16.msra.mxu0 %v238
    %341 = vmatprep.subr.bf16.mxu0 %v243
    %342 = vmatpush1.bf16.msra.mxu0 %v242
    %343 = vmatprep.subr.bf16.mxu0 %v247
    %344 = vmatpush1.bf16.msra.mxu0 %v246
    %345 = vmatprep.subr.bf16.mxu0 %v251
    %346 = vmatpush1.bf16.msra.mxu0 %v250
    %347 = vmatprep.subr.bf16.mxu0 %v255
    %348 = vmatpush1.bf16.msra.mxu0 %v254
    %349 = vmatprep.subr.bf16.mxu0 %v259
    %350 = vmatpush1.bf16.msra.mxu0 %v258
    %351 = vmatprep.subr.bf16.mxu0 %v263
    %352 = vmatpush1.bf16.msra.mxu0 %v262
    %353 = vmatprep.subr.bf16.mxu0 0
    %354 = vmatpush1.bf16.msra.mxu0 0
    %355 = vmatprep.subr.bf16.mxu0 0
    %356 = vmatpush1.bf16.msra.mxu0 0
    %357 = vmatprep.subr.bf16.mxu0 0
    %358 = vmatpush1.bf16.msra.mxu0 0
    %359 = vmatprep.subr.bf16.mxu0 0
    %360 = vmatpush1.bf16.msra.mxu0 0
    %361 = vmatprep.subr.bf16.mxu0 0
    %362 = vmatpush1.bf16.msra.mxu0 0
    %363 = vmatprep.subr.bf16.mxu0 0
    %364 = vmatpush1.bf16.msra.mxu0 0
    %365 = vmatprep.subr.bf16.mxu0 0
    %366 = vmatpush1.bf16.msra.mxu0 0
    %367 = vmatprep.subr.bf16.mxu0 0
    %368 = vmatpush1.bf16.msra.mxu0 0
    %369 = vmatprep.mubr.bf16.mxu0 0
    %370 = vmatmul.mubr.bf16.gmra.mrb[0].mxu0 %v81
    %v371 = vpop.f32.mrb[0].mxu0
    %v372 = vadd.f32 %v127, %v371
    %v373 = vpop.f32.mrb[0].mxu0
    %v374 = vadd.f32 %v131, %v373
    %v375 = vpop.f32.mrb[0].mxu0
    %v376 = vpop.f32.mrb[0].mxu0
    %377 = vdwg.mxu0
    %v378 = vmax.f32 %v331, 0.0
    %v379 = vmax.f32 %v333, 0.0
    %v380 = vmax.f32 %v372, 0.0
    %v381 = vmax.f32 %v374, 0.0
    %v382 = vpack.c.bf16 %v378, %v378
    %v383 = vpack.c.bf16 %v379, %v379
    %v384 = vpack.c.bf16 %v380, %v380
    %v385 = vpack.c.bf16 %v381, %v381
    %v386 = vld [vmem:[#allocation7] sm:$0xff]
    %v387 = vld [vmem:[#allocation7 + $0x8] sm:$0xff]
    %v388 = vld [vmem:[#allocation7 + $0x10] sm:$0xff]
    %v389 = vld [vmem:[#allocation7 + $0x18] sm:$0xff]
    %v390 = vld [vmem:[#allocation7 + $0x20] sm:$0xff]
    %v391 = vld [vmem:[#allocation7 + $0x28] sm:$0xff]
    %v392 = vld [vmem:[#allocation7 + $0x30] sm:$0xff]
    %v393 = vld [vmem:[#allocation7 + $0x38] sm:$0xff]
    %v394 = vld [vmem:[#allocation7 + $0x40] sm:$0xff]
    %v395 = vld [vmem:[#allocation7 + $0x48] sm:$0xff]
    %v396 = vld [vmem:[#allocation7 + $0x50] sm:$0xff]
    %v397 = vld [vmem:[#allocation7 + $0x58] sm:$0xff]
    %v398 = vld [vmem:[#allocation7 + $0x60] sm:$0xff]
    %v399 = vld [vmem:[#allocation7 + $0x68] sm:$0xff]
    %v400 = vld [vmem:[#allocation7 + $0x70] sm:$0xff]
    %v401 = vld [vmem:[#allocation7 + $0x78] sm:$0xff]
    %v402 = vld [vmem:[#allocation7 + $0x80] sm:$0xff]
    %v403 = vld [vmem:[#allocation7 + $0x88] sm:$0xff]
    %v404 = vld [vmem:[#allocation7 + $0x90] sm:$0xff]
    %v405 = vld [vmem:[#allocation7 + $0x98] sm:$0xff]
    %v406 = vld [vmem:[#allocation7 + $0xa0] sm:$0xff]
    %v407 = vld [vmem:[#allocation7 + $0xa8] sm:$0xff]
    %v408 = vld [vmem:[#allocation7 + $0xb0] sm:$0xff]
    %v409 = vld [vmem:[#allocation7 + $0xb8] sm:$0xff]
    %v410 = vld [vmem:[#allocation7 + $0xc0] sm:$0xff]
    %v411 = vld [vmem:[#allocation7 + $0xc8] sm:$0xff]
    %v412 = vld [vmem:[#allocation7 + $0xd0] sm:$0xff]
    %v413 = vld [vmem:[#allocation7 + $0xd8] sm:$0xff]
    %v414 = vld [vmem:[#allocation7 + $0xe0] sm:$0xff]
    %v415 = vld [vmem:[#allocation7 + $0xe8] sm:$0xff]
    %v416 = vld [vmem:[#allocation7 + $0xf0] sm:$0xff]
    %v417 = vld [vmem:[#allocation7 + $0xf8] sm:$0xff]
    %v418 = vld [vmem:[#allocation7 + $0x100] sm:$0xff]
    %v419 = vld [vmem:[#allocation7 + $0x108] sm:$0xff]
    %v420 = vld [vmem:[#allocation7 + $0x110] sm:$0xff]
    %v421 = vld [vmem:[#allocation7 + $0x118] sm:$0xff]
    %v422 = vld [vmem:[#allocation7 + $0x120] sm:$0xff]
    %v423 = vld [vmem:[#allocation7 + $0x128] sm:$0xff]
    %v424 = vld [vmem:[#allocation7 + $0x130] sm:$0xff]
    %v425 = vld [vmem:[#allocation7 + $0x138] sm:$0xff]
    %v426 = vld [vmem:[#allocation7 + $0x140] sm:$0xff]
    %v427 = vld [vmem:[#allocation7 + $0x148] sm:$0xff]
    %v428 = vld [vmem:[#allocation7 + $0x150] sm:$0xff]
    %v429 = vld [vmem:[#allocation7 + $0x158] sm:$0xff]
    %v430 = vld [vmem:[#allocation7 + $0x160] sm:$0xff]
    %v431 = vld [vmem:[#allocation7 + $0x168] sm:$0xff]
    %v432 = vld [vmem:[#allocation7 + $0x170] sm:$0xff]
    %v433 = vld [vmem:[#allocation7 + $0x178] sm:$0xff]
    %v434 = vld [vmem:[#allocation7 + $0x180] sm:$0xff]
    %v435 = vld [vmem:[#allocation7 + $0x188] sm:$0xff]
    %v436 = vld [vmem:[#allocation7 + $0x190] sm:$0xff]
    %v437 = vld [vmem:[#allocation7 + $0x198] sm:$0xff]
    %v438 = vld [vmem:[#allocation7 + $0x1a0] sm:$0xff]
    %v439 = vld [vmem:[#allocation7 + $0x1a8] sm:$0xff]
    %v440 = vld [vmem:[#allocation7 + $0x1b0] sm:$0xff]
    %v441 = vld [vmem:[#allocation7 + $0x1b8] sm:$0xff]
    %v442 = vld [vmem:[#allocation7 + $0x1c0] sm:$0xff]
    %v443 = vld [vmem:[#allocation7 + $0x1c8] sm:$0xff]
    %v444 = vld [vmem:[#allocation7 + $0x1d0] sm:$0xff]
    %v445 = vld [vmem:[#allocation7 + $0x1d8] sm:$0xff]
    %v446 = vld [vmem:[#allocation7 + $0x1e0] sm:$0xff]
    %v447 = vld [vmem:[#allocation7 + $0x1e8] sm:$0xff]
    %v448 = vld [vmem:[#allocation7 + $0x1f0] sm:$0xff]
    %v449 = vld [vmem:[#allocation7 + $0x1f8] sm:$0xff]
    %v450 = vld [vmem:[%s4] sm:$0x3]
    %v452 = vlaneseq
    %v453 = vshrl.u32 %v452, 7
    %v454 = vsub.s32 0, %v453
    %v455 = vrot.slane %v450, %v454
    %v456 = vlaneseq
    %v457 = vshrl.u32 %v456, 7
    %v458 = vsub.s32 1, %v457
    %v459 = vrot.slane %v450, %v458
    %v526 = vunpack.c.l.b16 %v386
    %v527 = vunpack.c.h.b16 %v386
    %v528 = vunpack.c.l.b16 %v387
    %v529 = vunpack.c.h.b16 %v387
    %v530 = vunpack.c.l.b16 %v388
    %v531 = vunpack.c.h.b16 %v388
    %v532 = vunpack.c.l.b16 %v389
    %v533 = vunpack.c.h.b16 %v389
    %v534 = vunpack.c.l.b16 %v390
    %v535 = vunpack.c.h.b16 %v390
    %v536 = vunpack.c.l.b16 %v391
    %v537 = vunpack.c.h.b16 %v391
    %v538 = vunpack.c.l.b16 %v392
    %v539 = vunpack.c.h.b16 %v392
    %v540 = vunpack.c.l.b16 %v393
    %v541 = vunpack.c.h.b16 %v393
    %v542 = vunpack.c.l.b16 %v394
    %v543 = vunpack.c.h.b16 %v394
    %v544 = vunpack.c.l.b16 %v395
    %v545 = vunpack.c.h.b16 %v395
    %v546 = vunpack.c.l.b16 %v396
    %v547 = vunpack.c.h.b16 %v396
    %v548 = vunpack.c.l.b16 %v397
    %v549 = vunpack.c.h.b16 %v397
    %v550 = vunpack.c.l.b16 %v398
    %v551 = vunpack.c.h.b16 %v398
    %v552 = vunpack.c.l.b16 %v399
    %v553 = vunpack.c.h.b16 %v399
    %v554 = vunpack.c.l.b16 %v400
    %v555 = vunpack.c.h.b16 %v400
    %v556 = vunpack.c.l.b16 %v401
    %v557 = vunpack.c.h.b16 %v401
    %v558 = vunpack.c.l.b16 %v402
    %v559 = vunpack.c.h.b16 %v402
    %v560 = vunpack.c.l.b16 %v403
    %v561 = vunpack.c.h.b16 %v403
    %v562 = vunpack.c.l.b16 %v404
    %v563 = vunpack.c.h.b16 %v404
    %v564 = vunpack.c.l.b16 %v405
    %v565 = vunpack.c.h.b16 %v405
    %v566 = vunpack.c.l.b16 %v406
    %v567 = vunpack.c.h.b16 %v406
    %v568 = vunpack.c.l.b16 %v407
    %v569 = vunpack.c.h.b16 %v407
    %v570 = vunpack.c.l.b16 %v408
    %v571 = vunpack.c.h.b16 %v408
    %v572 = vunpack.c.l.b16 %v409
    %v573 = vunpack.c.h.b16 %v409
    %v574 = vunpack.c.l.b16 %v410
    %v575 = vunpack.c.h.b16 %v410
    %v576 = vunpack.c.l.b16 %v411
    %v577 = vunpack.c.h.b16 %v411
    %v578 = vunpack.c.l.b16 %v412
    %v579 = vunpack.c.h.b16 %v412
    %v580 = vunpack.c.l.b16 %v413
    %v581 = vunpack.c.h.b16 %v413
    %v582 = vunpack.c.l.b16 %v414
    %v583 = vunpack.c.h.b16 %v414
    %v584 = vunpack.c.l.b16 %v415
    %v585 = vunpack.c.h.b16 %v415
    %v586 = vunpack.c.l.b16 %v416
    %v587 = vunpack.c.h.b16 %v416
    %v588 = vunpack.c.l.b16 %v417
    %v589 = vunpack.c.h.b16 %v417
    %v590 = vunpack.c.l.b16 %v418
    %v591 = vunpack.c.h.b16 %v418
    %v592 = vunpack.c.l.b16 %v419
    %v593 = vunpack.c.h.b16 %v419
    %v594 = vunpack.c.l.b16 %v420
    %v595 = vunpack.c.h.b16 %v420
    %v596 = vunpack.c.l.b16 %v421
    %v597 = vunpack.c.h.b16 %v421
    %v598 = vunpack.c.l.b16 %v422
    %v599 = vunpack.c.h.b16 %v422
    %v600 = vunpack.c.l.b16 %v423
    %v601 = vunpack.c.h.b16 %v423
    %v602 = vunpack.c.l.b16 %v424
    %v603 = vunpack.c.h.b16 %v424
    %v604 = vunpack.c.l.b16 %v425
    %v605 = vunpack.c.h.b16 %v425
    %v606 = vunpack.c.l.b16 %v426
    %v607 = vunpack.c.h.b16 %v426
    %v608 = vunpack.c.l.b16 %v427
    %v609 = vunpack.c.h.b16 %v427
    %v610 = vunpack.c.l.b16 %v428
    %v611 = vunpack.c.h.b16 %v428
    %v612 = vunpack.c.l.b16 %v429
    %v613 = vunpack.c.h.b16 %v429
    %v614 = vunpack.c.l.b16 %v430
    %v615 = vunpack.c.h.b16 %v430
    %v616 = vunpack.c.l.b16 %v431
    %v617 = vunpack.c.h.b16 %v431
    %v618 = vunpack.c.l.b16 %v432
    %v619 = vunpack.c.h.b16 %v432
    %v620 = vunpack.c.l.b16 %v433
    %v621 = vunpack.c.h.b16 %v433
    %v622 = vunpack.c.l.b16 %v434
    %v623 = vunpack.c.h.b16 %v434
    %v624 = vunpack.c.l.b16 %v435
    %v625 = vunpack.c.h.b16 %v435
    %v626 = vunpack.c.l.b16 %v436
    %v627 = vunpack.c.h.b16 %v436
    %v628 = vunpack.c.l.b16 %v437
    %v629 = vunpack.c.h.b16 %v437
    %v630 = vunpack.c.l.b16 %v438
    %v631 = vunpack.c.h.b16 %v438
    %v632 = vunpack.c.l.b16 %v439
    %v633 = vunpack.c.h.b16 %v439
    %v634 = vunpack.c.l.b16 %v440
    %v635 = vunpack.c.h.b16 %v440
    %v636 = vunpack.c.l.b16 %v441
    %v637 = vunpack.c.h.b16 %v441
    %v638 = vunpack.c.l.b16 %v442
    %v639 = vunpack.c.h.b16 %v442
    %v640 = vunpack.c.l.b16 %v443
    %v641 = vunpack.c.h.b16 %v443
    %v642 = vunpack.c.l.b16 %v444
    %v643 = vunpack.c.h.b16 %v444
    %v644 = vunpack.c.l.b16 %v445
    %v645 = vunpack.c.h.b16 %v445
    %v646 = vunpack.c.l.b16 %v446
    %v647 = vunpack.c.h.b16 %v446
    %v648 = vunpack.c.l.b16 %v447
    %v649 = vunpack.c.h.b16 %v447
    %v650 = vunpack.c.l.b16 %v448
    %v651 = vunpack.c.h.b16 %v448
    %v652 = vunpack.c.l.b16 %v449
    %v653 = vunpack.c.h.b16 %v449
    %v654 = vpack.c.b16 %v528, %v526
    %v655 = vpack.c.b16 %v529, %v527
    %v656 = vpack.c.b16 %v532, %v530
    %v657 = vpack.c.b16 %v533, %v531
    %v658 = vpack.c.b16 %v536, %v534
    %v659 = vpack.c.b16 %v537, %v535
    %v660 = vpack.c.b16 %v540, %v538
    %v661 = vpack.c.b16 %v541, %v539
    %v662 = vpack.c.b16 %v544, %v542
    %v663 = vpack.c.b16 %v545, %v543
    %v664 = vpack.c.b16 %v548, %v546
    %v665 = vpack.c.b16 %v549, %v547
    %v666 = vpack.c.b16 %v552, %v550
    %v667 = vpack.c.b16 %v553, %v551
    %v668 = vpack.c.b16 %v556, %v554
    %v669 = vpack.c.b16 %v557, %v555
    %v670 = vpack.c.b16 %v560, %v558
    %v671 = vpack.c.b16 %v561, %v559
    %v672 = vpack.c.b16 %v564, %v562
    %v673 = vpack.c.b16 %v565, %v563
    %v674 = vpack.c.b16 %v568, %v566
    %v675 = vpack.c.b16 %v569, %v567
    %v676 = vpack.c.b16 %v572, %v570
    %v677 = vpack.c.b16 %v573, %v571
    %v678 = vpack.c.b16 %v576, %v574
    %v679 = vpack.c.b16 %v577, %v575
    %v680 = vpack.c.b16 %v580, %v578
    %v681 = vpack.c.b16 %v581, %v579
    %v682 = vpack.c.b16 %v584, %v582
    %v683 = vpack.c.b16 %v585, %v583
    %v684 = vpack.c.b16 %v588, %v586
    %v685 = vpack.c.b16 %v589, %v587
    %v686 = vpack.c.b16 %v592, %v590
    %v687 = vpack.c.b16 %v593, %v591
    %v688 = vpack.c.b16 %v596, %v594
    %v689 = vpack.c.b16 %v597, %v595
    %v690 = vpack.c.b16 %v600, %v598
    %v691 = vpack.c.b16 %v601, %v599
    %v692 = vpack.c.b16 %v604, %v602
    %v693 = vpack.c.b16 %v605, %v603
    %v694 = vpack.c.b16 %v608, %v606
    %v695 = vpack.c.b16 %v609, %v607
    %v696 = vpack.c.b16 %v612, %v610
    %v697 = vpack.c.b16 %v613, %v611
    %v698 = vpack.c.b16 %v616, %v614
    %v699 = vpack.c.b16 %v617, %v615
    %v700 = vpack.c.b16 %v620, %v618
    %v701 = vpack.c.b16 %v621, %v619
    %v702 = vpack.c.b16 %v624, %v622
    %v703 = vpack.c.b16 %v625, %v623
    %v704 = vpack.c.b16 %v628, %v626
    %v705 = vpack.c.b16 %v629, %v627
    %v706 = vpack.c.b16 %v632, %v630
    %v707 = vpack.c.b16 %v633, %v631
    %v708 = vpack.c.b16 %v636, %v634
    %v709 = vpack.c.b16 %v637, %v635
    %v710 = vpack.c.b16 %v640, %v638
    %v711 = vpack.c.b16 %v641, %v639
    %v712 = vpack.c.b16 %v644, %v642
    %v713 = vpack.c.b16 %v645, %v643
    %v714 = vpack.c.b16 %v648, %v646
    %v715 = vpack.c.b16 %v649, %v647
    %v716 = vpack.c.b16 %v652, %v650
    %v717 = vpack.c.b16 %v653, %v651
    %782 = vmatprep.subr.bf16.mxu0 %v655
    %783 = vmatpush1.bf16.msra.mxu0 %v654
    %784 = vmatprep.subr.bf16.mxu0 %v657
    %785 = vmatpush1.bf16.msra.mxu0 %v656
    %786 = vmatprep.subr.bf16.mxu0 %v659
    %787 = vmatpush1.bf16.msra.mxu0 %v658
    %788 = vmatprep.subr.bf16.mxu0 %v661
    %789 = vmatpush1.bf16.msra.mxu0 %v660
    %790 = vmatprep.subr.bf16.mxu0 %v663
    %791 = vmatpush1.bf16.msra.mxu0 %v662
    %792 = vmatprep.subr.bf16.mxu0 %v665
    %793 = vmatpush1.bf16.msra.mxu0 %v664
    %794 = vmatprep.subr.bf16.mxu0 %v667
    %795 = vmatpush1.bf16.msra.mxu0 %v666
    %796 = vmatprep.subr.bf16.mxu0 %v669
    %797 = vmatpush1.bf16.msra.mxu0 %v668
    %798 = vmatprep.subr.bf16.mxu0 %v671
    %799 = vmatpush1.bf16.msra.mxu0 %v670
    %800 = vmatprep.subr.bf16.mxu0 %v673
    %801 = vmatpush1.bf16.msra.mxu0 %v672
    %802 = vmatprep.subr.bf16.mxu0 %v675
    %803 = vmatpush1.bf16.msra.mxu0 %v674
    %804 = vmatprep.subr.bf16.mxu0 %v677
    %805 = vmatpush1.bf16.msra.mxu0 %v676
    %806 = vmatprep.subr.bf16.mxu0 %v679
    %807 = vmatpush1.bf16.msra.mxu0 %v678
    %808 = vmatprep.subr.bf16.mxu0 %v681
    %809 = vmatpush1.bf16.msra.mxu0 %v680
    %810 = vmatprep.subr.bf16.mxu0 %v683
    %811 = vmatpush1.bf16.msra.mxu0 %v682
    %812 = vmatprep.subr.bf16.mxu0 %v685
    %813 = vmatpush1.bf16.msra.mxu0 %v684
    %814 = vmatprep.mubr.bf16.mxu0 %v383
    %815 = vmatmul.mubr.bf16.gmra.mrb[0].mxu0 %v382
    %v816 = vpop.f32.mrb[0].mxu0
    %v817 = vadd.f32 %v455, %v816
    %v818 = vpop.f32.mrb[0].mxu0
    %v819 = vadd.f32 %v459, %v818
    %v820 = vpop.f32.mrb[0].mxu0
    %v821 = vpop.f32.mrb[0].mxu0
    %822 = vdwg.mxu0
    %823 = vmatprep.subr.bf16.mxu0 %v687
    %824 = vmatpush1.bf16.msra.mxu0 %v686
    %825 = vmatprep.subr.bf16.mxu0 %v689
    %826 = vmatpush1.bf16.msra.mxu0 %v688
    %827 = vmatprep.subr.bf16.mxu0 %v691
    %828 = vmatpush1.bf16.msra.mxu0 %v690
    %829 = vmatprep.subr.bf16.mxu0 %v693
    %830 = vmatpush1.bf16.msra.mxu0 %v692
    %831 = vmatprep.subr.bf16.mxu0 %v695
    %832 = vmatpush1.bf16.msra.mxu0 %v694
    %833 = vmatprep.subr.bf16.mxu0 %v697
    %834 = vmatpush1.bf16.msra.mxu0 %v696
    %835 = vmatprep.subr.bf16.mxu0 %v699
    %836 = vmatpush1.bf16.msra.mxu0 %v698
    %837 = vmatprep.subr.bf16.mxu0 %v701
    %838 = vmatpush1.bf16.msra.mxu0 %v700
    %839 = vmatprep.subr.bf16.mxu0 %v703
    %840 = vmatpush1.bf16.msra.mxu0 %v702
    %841 = vmatprep.subr.bf16.mxu0 %v705
    %842 = vmatpush1.bf16.msra.mxu0 %v704
    %843 = vmatprep.subr.bf16.mxu0 %v707
    %844 = vmatpush1.bf16.msra.mxu0 %v706
    %845 = vmatprep.subr.bf16.mxu0 %v709
    %846 = vmatpush1.bf16.msra.mxu0 %v708
    %847 = vmatprep.subr.bf16.mxu0 %v711
    %848 = vmatpush1.bf16.msra.mxu0 %v710
    %849 = vmatprep.subr.bf16.mxu0 %v713
    %850 = vmatpush1.bf16.msra.mxu0 %v712
    %851 = vmatprep.subr.bf16.mxu0 %v715
    %852 = vmatpush1.bf16.msra.mxu0 %v714
    %853 = vmatprep.subr.bf16.mxu0 %v717
    %854 = vmatpush1.bf16.msra.mxu0 %v716
    %855 = vmatprep.mubr.bf16.mxu0 %v385
    %856 = vmatmul.mubr.bf16.gmra.mrb[0].mxu0 %v384
    %v857 = vpop.f32.mrb[0].mxu0
    %v858 = vadd.f32 %v817, %v857
    %v859 = vpop.f32.mrb[0].mxu0
    %v860 = vadd.f32 %v819, %v859
    %v861 = vpop.f32.mrb[0].mxu0
    %v862 = vpop.f32.mrb[0].mxu0
    %863 = vdwg.mxu0
    %v864 = vmax.f32 %v858, 0.0
    %v865 = vmax.f32 %v860, 0.0
    %v866 = vpack.c.bf16 %v864, %v864
    %v867 = vpack.c.bf16 %v865, %v865
    %v868 = vld [vmem:[#allocation8] sm:$0xf]
    %v869 = vld [vmem:[#allocation8 + $0x4] sm:$0xf]
    %v870 = vld [vmem:[#allocation8 + $0x8] sm:$0xf]
    %v871 = vld [vmem:[#allocation8 + $0xc] sm:$0xf]
    %v872 = vld [vmem:[#allocation8 + $0x10] sm:$0xf]
    %v873 = vld [vmem:[#allocation8 + $0x14] sm:$0xf]
    %v874 = vld [vmem:[#allocation8 + $0x18] sm:$0xf]
    %v875 = vld [vmem:[#allocation8 + $0x1c] sm:$0xf]
    %v876 = vld [vmem:[#allocation8 + $0x20] sm:$0xf]
    %v877 = vld [vmem:[#allocation8 + $0x24] sm:$0xf]
    %v878 = vld [vmem:[#allocation8 + $0x28] sm:$0xf]
    %v879 = vld [vmem:[#allocation8 + $0x2c] sm:$0xf]
    %v880 = vld [vmem:[#allocation8 + $0x30] sm:$0xf]
    %v881 = vld [vmem:[#allocation8 + $0x34] sm:$0xf]
    %v882 = vld [vmem:[#allocation8 + $0x38] sm:$0xf]
    %v883 = vld [vmem:[#allocation8 + $0x3c] sm:$0xf]
    %v884 = vld [vmem:[#allocation8 + $0x40] sm:$0xf]
    %v885 = vld [vmem:[#allocation8 + $0x44] sm:$0xf]
    %v886 = vld [vmem:[#allocation8 + $0x48] sm:$0xf]
    %v887 = vld [vmem:[#allocation8 + $0x4c] sm:$0xf]
    %v888 = vld [vmem:[#allocation8 + $0x50] sm:$0xf]
    %v889 = vld [vmem:[#allocation8 + $0x54] sm:$0xf]
    %v890 = vld [vmem:[#allocation8 + $0x58] sm:$0xf]
    %v891 = vld [vmem:[#allocation8 + $0x5c] sm:$0xf]
    %v892 = vld [vmem:[#allocation8 + $0x60] sm:$0xf]
    %v893 = vld [vmem:[#allocation8 + $0x64] sm:$0xf]
    %v894 = vld [vmem:[#allocation8 + $0x68] sm:$0xf]
    %v895 = vld [vmem:[#allocation8 + $0x6c] sm:$0xf]
    %v896 = vld [vmem:[#allocation8 + $0x70] sm:$0xf]
    %v897 = vld [vmem:[#allocation8 + $0x74] sm:$0xf]
    %v898 = vld [vmem:[#allocation8 + $0x78] sm:$0xf]
    %v899 = vld [vmem:[#allocation8 + $0x7c] sm:$0xf]
    %v900 = vld [vmem:[%s6] sm:$0x1]
    %v902 = vlaneseq
    %v903 = vshrl.u32 %v902, 7
    %v904 = vsub.s32 0, %v903
    %v905 = vrot.slane %v900, %v904
    %v939 = vunpack.c.l.b16 %v868
    %v940 = vunpack.c.l.b16 %v869
    %v941 = vunpack.c.l.b16 %v870
    %v942 = vunpack.c.l.b16 %v871
    %v943 = vunpack.c.l.b16 %v872
    %v944 = vunpack.c.l.b16 %v873
    %v945 = vunpack.c.l.b16 %v874
    %v946 = vunpack.c.l.b16 %v875
    %v947 = vunpack.c.l.b16 %v876
    %v948 = vunpack.c.l.b16 %v877
    %v949 = vunpack.c.l.b16 %v878
    %v950 = vunpack.c.l.b16 %v879
    %v951 = vunpack.c.l.b16 %v880
    %v952 = vunpack.c.l.b16 %v881
    %v953 = vunpack.c.l.b16 %v882
    %v954 = vunpack.c.l.b16 %v883
    %v955 = vunpack.c.l.b16 %v884
    %v956 = vunpack.c.l.b16 %v885
    %v957 = vunpack.c.l.b16 %v886
    %v958 = vunpack.c.l.b16 %v887
    %v959 = vunpack.c.l.b16 %v888
    %v960 = vunpack.c.l.b16 %v889
    %v961 = vunpack.c.l.b16 %v890
    %v962 = vunpack.c.l.b16 %v891
    %v963 = vunpack.c.l.b16 %v892
    %v964 = vunpack.c.l.b16 %v893
    %v965 = vunpack.c.l.b16 %v894
    %v966 = vunpack.c.l.b16 %v895
    %v967 = vunpack.c.l.b16 %v896
    %v968 = vunpack.c.l.b16 %v897
    %v969 = vunpack.c.l.b16 %v898
    %v970 = vunpack.c.l.b16 %v899
    %v971 = vpack.c.b16 %v940, %v939
    %v972 = vpack.c.b16 %v942, %v941
    %v973 = vpack.c.b16 %v944, %v943
    %v974 = vpack.c.b16 %v946, %v945
    %v975 = vpack.c.b16 %v948, %v947
    %v976 = vpack.c.b16 %v950, %v949
    %v977 = vpack.c.b16 %v952, %v951
    %v978 = vpack.c.b16 %v954, %v953
    %v979 = vpack.c.b16 %v956, %v955
    %v980 = vpack.c.b16 %v958, %v957
    %v981 = vpack.c.b16 %v960, %v959
    %v982 = vpack.c.b16 %v962, %v961
    %v983 = vpack.c.b16 %v964, %v963
    %v984 = vpack.c.b16 %v966, %v965
    %v985 = vpack.c.b16 %v968, %v967
    %v986 = vpack.c.b16 %v970, %v969
    %1003 = vmatprep.subr.bf16.mxu0 0
    %1004 = vmatpush1.bf16.msra.mxu0 %v971
    %1005 = vmatprep.subr.bf16.mxu0 0
    %1006 = vmatpush1.bf16.msra.mxu0 %v972
    %1007 = vmatprep.subr.bf16.mxu0 0
    %1008 = vmatpush1.bf16.msra.mxu0 %v973
    %1009 = vmatprep.subr.bf16.mxu0 0
    %1010 = vmatpush1.bf16.msra.mxu0 %v974
    %1011 = vmatprep.subr.bf16.mxu0 0
    %1012 = vmatpush1.bf16.msra.mxu0 %v975
    %1013 = vmatprep.subr.bf16.mxu0 0
    %1014 = vmatpush1.bf16.msra.mxu0 %v976
    %1015 = vmatprep.subr.bf16.mxu0 0
    %1016 = vmatpush1.bf16.msra.mxu0 %v977
    %1017 = vmatprep.subr.bf16.mxu0 0
    %1018 = vmatpush1.bf16.msra.mxu0 %v978
    %1019 = vmatprep.subr.bf16.mxu0 0
    %1020 = vmatpush1.bf16.msra.mxu0 %v979
    %1021 = vmatprep.subr.bf16.mxu0 0
    %1022 = vmatpush1.bf16.msra.mxu0 %v980
    %1023 = vmatprep.subr.bf16.mxu0 0
    %1024 = vmatpush1.bf16.msra.mxu0 %v981
    %1025 = vmatprep.subr.bf16.mxu0 0
    %1026 = vmatpush1.bf16.msra.mxu0 %v982
    %1027 = vmatprep.subr.bf16.mxu0 0
    %1028 = vmatpush1.bf16.msra.mxu0 %v983
    %1029 = vmatprep.subr.bf16.mxu0 0
    %1030 = vmatpush1.bf16.msra.mxu0 %v984
    %1031 = vmatprep.subr.bf16.mxu0 0
    %1032 = vmatpush1.bf16.msra.mxu0 %v985
    %1033 = vmatprep.subr.bf16.mxu0 0
    %1034 = vmatpush1.bf16.msra.mxu0 %v986
    %1035 = vmatprep.mubr.bf16.mxu0 %v867
    %1036 = vmatmul.mubr.bf16.gmra.mrb[0].mxu0 %v866
    %v1037 = vpop.f32.mrb[0].mxu0
    %v1038 = vadd.f32 %v905, %v1037
    %v1039 = vpop.f32.mrb[0].mxu0
    %v1040 = vpop.f32.mrb[0].mxu0
    %v1041 = vpop.f32.mrb[0].mxu0
    %1042 = vdwg.mxu0
    %1043 = vmax.xlane.f32.xlu0 %v1038
    %v1044 = vpop.xlane.xlu0 %1043
    %v1045 = vsub.f32 %v1038, %v1044
    %v1046 = vmul.f32 %v1045, 1.442695
    %v1047 = vpow.pop %v1046
    %1048 = vadd.xlane.f32.xlu0 %v1047
    %v1049 = vpop.xlane.xlu0 %1048
    %v1050 = vlog2.pop %v1049
    %v1051 = vmul.f32 %v1050, 0.6931472
    %v1052 = vsub.f32 %v1045, %v1051
    %1053 = vst [vmem:[#allocation10] sm:$0xff] %v1052
    // Predicated region
    $region46: #{tpu_custom_call.1} parent=1 // pred_check
      _
    $region47: #{tpu_custom_call.1} parent=1 // pred_check_branch
      %1055 = sbr.rel (0) target = $region49
    $region48: #{tpu_custom_call.1} parent=1 // pred_region
      %s1057 = ssub.s32 128, 128
      %1058 = vsyncadd [#allocation4], %s1057
      %s1060 = sshll.u32 [#allocation10], 4
      %s1061 = int_to_ptr.vmem [resolvable:$true] %s1060
      %1063 = dma.vmem_to_hbm [thread:$0]  %s1061, 128, %s7, [#allocation4]
    $region49: #{tpu_custom_call.1} parent=1 // pred_fallthru
      _
    // Predicated region
    $region50: #{tpu_custom_call.1} parent=1 // pred_check
      _
    $region51: #{tpu_custom_call.1} parent=1 // pred_check_branch
      %1065 = sbr.rel (0) target = $region53
    $region52: #{tpu_custom_call.1} parent=1 // pred_region
      %1066 = dma.done [#allocation4], 128
    $region53: #{tpu_custom_call.1} parent=1 // pred_fallthru
      _
    %1067 = vsyncpa [#allocation3], 1
    %1068 = vsyncpa [#allocation6], 1
    %1069 = vsyncpa [#allocation9], 1
    %1070 = vsyncpa [#allocation4], 1

</llo_original>
